<compile_context>
chip_gen: v7x
topology: tpu7x:2x2x1
jax: 0.10.0
libtpu: 0.0.40
codegen_flags: <defaults>
</compile_context>

<pallas_src>
import jax
import jax.numpy as jnp
from jax import lax
from jax.experimental import pallas as pl
from jax.experimental.pallas import tpu as pltpu


def _pair(v):
    return (v, v) if isinstance(v, int) else (int(v[0]), int(v[1]))


def lowpass_conv2d(x_nchw, *, out_channels, kernel_size, stride=1, padding=0,
                   dilation=1, groups=1, bias=None):
    """Forward pass of LowPassConv2d (F.conv2d with fixed ones/(kh*kw) weight)."""
    kh, kw = _pair(kernel_size)
    sh, sw = _pair(stride)
    ph, pw = _pair(padding)
    dh, dw = _pair(dilation)

    n, cin, h, w = x_nchw.shape
    assert cin % groups == 0 and out_channels % groups == 0
    cin_g = cin // groups
    cout_g = out_channels // groups

    h_pad, w_pad = h + 2 * ph, w + 2 * pw
    h_full = h_pad - dh * (kh - 1)          # stride-1 output extents
    w_full = w_pad - dw * (kw - 1)
    assert h_full > 0 and w_full > 0, "kernel larger than padded input"
    h_out = (h_full - 1) // sh + 1
    w_out = (w_full - 1) // sw + 1

    inv_taps = 1.0 / float(kh * kw)         # single f32 scale at the end
    has_bias = bias is not None
    has_pad = (ph > 0) or (pw > 0)

    _SMALL = 8                              # unroll threshold for static loops

    # Column (output) stride is folded into the row-pass loads; row stride is
    # folded into the column-pass loads.  stride=1 paths stay plain slices.
    def _row_ds(j):                         # lane axis of the padded plane
        start = j * dw
        return pl.ds(start, w_out, stride=sw) if sw > 1 else pl.ds(start, w_out)

    def _col_ds(i):                         # sublane axis of the rowsum plane
        start = i * dh
        return pl.ds(start, h_out, stride=sh) if sh > 1 else pl.ds(start, h_out)

    def kernel(*refs):
        if has_bias:
            x_ref, b_ref, o_ref, plane_ref, rowsum_ref = refs
        else:
            x_ref, o_ref, plane_ref, rowsum_ref = refs
            b_ref = None

        g = pl.program_id(1)

        # ---- 0) refresh the zero halo (interior is overwritten below) ------
        if has_pad:
            plane_ref[...] = jnp.zeros_like(plane_ref)

        # ---- 1) channel sum of this group (one (h, w) plane live at a time)
        if cin_g <= _SMALL:
            chan_sum = x_ref[0].astype(jnp.float32)
            for c in range(1, cin_g):
                chan_sum = chan_sum + x_ref[c].astype(jnp.float32)
        else:
            chan_sum = lax.fori_loop(
                1, cin_g,
                lambda c, acc: acc + x_ref[c].astype(jnp.float32),
                x_ref[0].astype(jnp.float32))
        plane_ref[ph:ph + h, pw:pw + w] = chan_sum

        # ---- 2a) row pass: lane-shifted ref loads, result to scratch -------
        acc = plane_ref[:, _row_ds(0)]
        for j in range(1, kw):
            acc = acc + plane_ref[:, _row_ds(j)]
        rowsum_ref[...] = acc                                  # (h_pad, w_out)

        # ---- 2b) column pass: sublane-offset / strided ref loads -----------
        box = rowsum_ref[_col_ds(0), :]
        for i in range(1, kh):
            box = box + rowsum_ref[_col_ds(i), :]
        out2d = box * inv_taps                                 # (h_out, w_out) f32

        # ---- 3) per-channel stores (bias fused), one plane live at a time --
        if has_bias:
            if cout_g <= _SMALL:
                for c in range(cout_g):
                    o_ref[c] = (out2d + b_ref[g * cout_g + c]).astype(o_ref.dtype)
            else:
                def _store(c, carry):
                    o_ref[c] = (out2d + b_ref[g * cout_g + c]).astype(o_ref.dtype)
                    return carry
                lax.fori_loop(0, cout_g, _store, 0)
        else:
            out_cast = out2d.astype(o_ref.dtype)
            if cout_g <= _SMALL:
                for c in range(cout_g):
                    o_ref[c] = out_cast
            else:
                def _store(c, carry):
                    o_ref[c] = out_cast
                    return carry
                lax.fori_loop(0, cout_g, _store, 0)

    in_specs = [pl.BlockSpec((None, cin_g, h, w), lambda i, g: (i, g, 0, 0))]
    args = [x_nchw]
    if has_bias:
        # bias lives whole in SMEM (tiny); statically skipped when None
        in_specs.append(pl.BlockSpec(memory_space=pltpu.MemorySpace.SMEM))
        args.append(jnp.asarray(bias, dtype=jnp.float32).reshape(out_channels))

    # VMEM budget: double-buffered input + output blocks plus the two scratch
    # planes (clamped to a safe [32 MiB, 64 MiB] scoped-VMEM window).
    dsz = x_nchw.dtype.itemsize
    in_block_b = cin_g * h * w * dsz
    out_block_b = cout_g * h_out * w_out * dsz
    scratch_b = (h_pad * w_pad + h_pad * w_out) * 4
    needed = 2 * (in_block_b + out_block_b) + scratch_b
    vmem_limit = int(min(64 * 2 ** 20, max(32 * 2 ** 20, 2 * needed)))

    flops = n * groups * (cin_g * h * w + (kw - 1) * h_pad * w_out
                          + kh * h_out * w_out)
    bytes_accessed = n * (cin * h * w + out_channels * h_out * w_out) * dsz

    return pl.pallas_call(
        kernel,
        out_shape=jax.ShapeDtypeStruct((n, out_channels, h_out, w_out),
                                       x_nchw.dtype),
        grid_spec=pltpu.PrefetchScalarGridSpec(
            num_scalar_prefetch=0,
            grid=(n, groups),
            in_specs=in_specs,
            out_specs=pl.BlockSpec((None, cout_g, h_out, w_out),
                                   lambda i, g: (i, g, 0, 0)),
            scratch_shapes=[pltpu.VMEM((h_pad, w_pad), jnp.float32),
                            pltpu.VMEM((h_pad, w_out), jnp.float32)]),
        compiler_params=pltpu.CompilerParams(
            dimension_semantics=("parallel", "parallel"),
            vmem_limit_bytes=vmem_limit),
        cost_estimate=pl.CostEstimate(flops=int(flops), transcendentals=0,
                                      bytes_accessed=int(bytes_accessed)),
    )(*args)


def _conv_ref(x, cout, kh, kw, stride, pad, dil, groups, bias=None):
    """XLA reference with the same fixed 1/(kh*kw) weight (F.conv2d semantics)."""
    cin = x.shape[1]
    w_ref = jnp.full((cout, cin // groups, kh, kw), 1.0 / (kh * kw), jnp.float32)
    out = lax.conv_general_dilated(
        x, w_ref, window_strides=(stride, stride),
        padding=((pad, pad), (pad, pad)),
        rhs_dilation=(dil, dil),
        dimension_numbers=("NCHW", "OIHW", "NCHW"),
        feature_group_count=groups,
        precision=lax.Precision.HIGHEST)
    if bias is not None:
        out = out + jnp.asarray(bias, jnp.float32).reshape(1, -1, 1, 1)
    return out


if __name__ == "__main__":
    key = jax.random.PRNGKey(0)
    kx, kb = jax.random.split(key)

    N, C, H, W = 2, 4, 16, 16
    KS = 3
    x = jax.random.normal(kx, (N, C, H, W), dtype=jnp.float32)

    # 1) LowPassConv2d(4, 4, 3, stride=1, padding=1, bias=False)
    out = lowpass_conv2d(x, out_channels=C, kernel_size=KS, stride=1, padding=1)
    out = jax.block_until_ready(out)
    ref = _conv_ref(x, C, KS, KS, 1, 1, 1, 1)
    assert out.shape == ref.shape
    assert float(jnp.max(jnp.abs(out - ref))) < 1e-4

    # 2) grouped / unpadded variant (groups=2, padding=0)
    G = 2
    out_g = lowpass_conv2d(x, out_channels=C, kernel_size=KS, stride=1,
                           padding=0, groups=G)
    out_g = jax.block_until_ready(out_g)
    ref_g = _conv_ref(x, C, KS, KS, 1, 0, 1, G)
    assert out_g.shape == ref_g.shape
    assert float(jnp.max(jnp.abs(out_g - ref_g))) < 1e-4

    # 3) bias=True variant with out_channels != in_channels
    COUT = 6
    b = jax.random.normal(kb, (COUT,), dtype=jnp.float32) / 10.0
    out_b = lowpass_conv2d(x, out_channels=COUT, kernel_size=KS, stride=1,
                           padding=1, bias=b)
    out_b = jax.block_until_ready(out_b)
    ref_b = _conv_ref(x, COUT, KS, KS, 1, 1, 1, 1, bias=b)
    assert out_b.shape == ref_b.shape
    assert float(jnp.max(jnp.abs(out_b - ref_b))) < 1e-4

    print("KERNEL_OK")
</pallas_src>

<mosaic_0001>
module attributes {stable_mosaic.version = 11 : i64} {
  func.func @kernel(%arg0: i32, %arg1: i32, %arg2: memref<1x4x16x16xf32, #tpu.memory_space<vmem>>, %arg3: memref<1x4x16x16xf32, #tpu.memory_space<vmem>>, %arg4: memref<18x18xf32, #tpu.memory_space<vmem>>, %arg5: memref<18x16xf32, #tpu.memory_space<vmem>>) attributes {dimension_semantics = [#tpu.dimension_semantics<parallel>, #tpu.dimension_semantics<parallel>], iteration_bounds = array<i64: 2, 1>, scalar_prefetch = 0 : i64, scratch_operands = 2 : i64, tpu.core_type = #tpu.core_type<tc>, window_params = [{transform_indices = @transform_0, window_bounds = array<i64: 1, 4, 16, 16>}, {transform_indices = @transform_1, window_bounds = array<i64: 1, 4, 16, 16>}]} {
    %cst = arith.constant 0.000000e+00 : f32
    %0 = vector.broadcast %cst : f32 to vector<18x18xf32>
    %c0 = arith.constant 0 : index
    %c0_0 = arith.constant 0 : index
    %1 = vector.load %arg4[%c0, %c0_0] : memref<18x18xf32, #tpu.memory_space<vmem>>, vector<18x18xf32>
    tpu.vector_store %arg4[%c0, %c0_0], %0 {strides = array<i32>} : memref<18x18xf32, #tpu.memory_space<vmem>>, vector<18x18xf32>,
    %c0_1 = arith.constant 0 : index
    %c0_2 = arith.constant 0 : index
    %c0_3 = arith.constant 0 : index
    %c0_4 = arith.constant 0 : index
    %2 = vector.load %arg2[%c0_1, %c0_2, %c0_3, %c0_4] : memref<1x4x16x16xf32, #tpu.memory_space<vmem>>, vector<1x1x16x16xf32>
    %3 = vector.shape_cast %2 : vector<1x1x16x16xf32> to vector<16x16xf32>
    %c0_5 = arith.constant 0 : index
    %c1 = arith.constant 1 : index
    %c0_6 = arith.constant 0 : index
    %c0_7 = arith.constant 0 : index
    %4 = vector.load %arg2[%c0_5, %c1, %c0_6, %c0_7] : memref<1x4x16x16xf32, #tpu.memory_space<vmem>>, vector<1x1x16x16xf32>
    %5 = vector.shape_cast %4 : vector<1x1x16x16xf32> to vector<16x16xf32>
    %6 = arith.addf %3, %5 : vector<16x16xf32>
    %c0_8 = arith.constant 0 : index
    %c2 = arith.constant 2 : index
    %c0_9 = arith.constant 0 : index
    %c0_10 = arith.constant 0 : index
    %7 = vector.load %arg2[%c0_8, %c2, %c0_9, %c0_10] : memref<1x4x16x16xf32, #tpu.memory_space<vmem>>, vector<1x1x16x16xf32>
    %8 = vector.shape_cast %7 : vector<1x1x16x16xf32> to vector<16x16xf32>
    %9 = arith.addf %6, %8 : vector<16x16xf32>
    %c0_11 = arith.constant 0 : index
    %c3 = arith.constant 3 : index
    %c0_12 = arith.constant 0 : index
    %c0_13 = arith.constant 0 : index
    %10 = vector.load %arg2[%c0_11, %c3, %c0_12, %c0_13] : memref<1x4x16x16xf32, #tpu.memory_space<vmem>>, vector<1x1x16x16xf32>
    %11 = vector.shape_cast %10 : vector<1x1x16x16xf32> to vector<16x16xf32>
    %12 = arith.addf %9, %11 : vector<16x16xf32>
    %c1_14 = arith.constant 1 : index
    %c1_15 = arith.constant 1 : index
    %13 = vector.load %arg4[%c1_14, %c1_15] : memref<18x18xf32, #tpu.memory_space<vmem>>, vector<16x16xf32>
    tpu.vector_store %arg4[%c1_14, %c1_15], %12 {strides = array<i32>} : memref<18x18xf32, #tpu.memory_space<vmem>>, vector<16x16xf32>,
    %c0_16 = arith.constant 0 : index
    %c0_17 = arith.constant 0 : index
    %14 = vector.load %arg4[%c0_16, %c0_17] : memref<18x18xf32, #tpu.memory_space<vmem>>, vector<18x16xf32>
    %c0_18 = arith.constant 0 : index
    %c1_19 = arith.constant 1 : index
    %15 = vector.load %arg4[%c0_18, %c1_19] : memref<18x18xf32, #tpu.memory_space<vmem>>, vector<18x16xf32>
    %16 = arith.addf %14, %15 : vector<18x16xf32>
    %c0_20 = arith.constant 0 : index
    %c2_21 = arith.constant 2 : index
    %17 = vector.load %arg4[%c0_20, %c2_21] : memref<18x18xf32, #tpu.memory_space<vmem>>, vector<18x16xf32>
    %18 = arith.addf %16, %17 : vector<18x16xf32>
    %c0_22 = arith.constant 0 : index
    %c0_23 = arith.constant 0 : index
    %19 = vector.load %arg5[%c0_22, %c0_23] : memref<18x16xf32, #tpu.memory_space<vmem>>, vector<18x16xf32>
    tpu.vector_store %arg5[%c0_22, %c0_23], %18 {strides = array<i32>} : memref<18x16xf32, #tpu.memory_space<vmem>>, vector<18x16xf32>,
    %c0_24 = arith.constant 0 : index
    %c0_25 = arith.constant 0 : index
    %20 = vector.load %arg5[%c0_24, %c0_25] : memref<18x16xf32, #tpu.memory_space<vmem>>, vector<16x16xf32>
    %c1_26 = arith.constant 1 : index
    %c0_27 = arith.constant 0 : index
    %21 = vector.load %arg5[%c1_26, %c0_27] : memref<18x16xf32, #tpu.memory_space<vmem>>, vector<16x16xf32>
    %22 = arith.addf %20, %21 : vector<16x16xf32>
    %c2_28 = arith.constant 2 : index
    %c0_29 = arith.constant 0 : index
    %23 = vector.load %arg5[%c2_28, %c0_29] : memref<18x16xf32, #tpu.memory_space<vmem>>, vector<16x16xf32>
    %24 = arith.addf %22, %23 : vector<16x16xf32>
    %cst_30 = arith.constant 0.111111112 : f32
    %25 = vector.broadcast %cst_30 : f32 to vector<16x16xf32>
    %26 = arith.mulf %24, %25 : vector<16x16xf32>
    %c0_31 = arith.constant 0 : index
    %c0_32 = arith.constant 0 : index
    %c0_33 = arith.constant 0 : index
    %c0_34 = arith.constant 0 : index
    %27 = vector.load %arg3[%c0_31, %c0_32, %c0_33, %c0_34] : memref<1x4x16x16xf32, #tpu.memory_space<vmem>>, vector<1x1x16x16xf32>
    %28 = vector.shape_cast %27 : vector<1x1x16x16xf32> to vector<16x16xf32>
    %29 = vector.shape_cast %26 : vector<16x16xf32> to vector<1x1x16x16xf32>
    tpu.vector_store %arg3[%c0_31, %c0_32, %c0_33, %c0_34], %29 {strides = array<i32>} : memref<1x4x16x16xf32, #tpu.memory_space<vmem>>, vector<1x1x16x16xf32>,
    %c0_35 = arith.constant 0 : index
    %c1_36 = arith.constant 1 : index
    %c0_37 = arith.constant 0 : index
    %c0_38 = arith.constant 0 : index
    %30 = vector.load %arg3[%c0_35, %c1_36, %c0_37, %c0_38] : memref<1x4x16x16xf32, #tpu.memory_space<vmem>>, vector<1x1x16x16xf32>
    %31 = vector.shape_cast %30 : vector<1x1x16x16xf32> to vector<16x16xf32>
    %32 = vector.shape_cast %26 : vector<16x16xf32> to vector<1x1x16x16xf32>
    tpu.vector_store %arg3[%c0_35, %c1_36, %c0_37, %c0_38], %32 {strides = array<i32>} : memref<1x4x16x16xf32, #tpu.memory_space<vmem>>, vector<1x1x16x16xf32>,
    %c0_39 = arith.constant 0 : index
    %c2_40 = arith.constant 2 : index
    %c0_41 = arith.constant 0 : index
    %c0_42 = arith.constant 0 : index
    %33 = vector.load %arg3[%c0_39, %c2_40, %c0_41, %c0_42] : memref<1x4x16x16xf32, #tpu.memory_space<vmem>>, vector<1x1x16x16xf32>
    %34 = vector.shape_cast %33 : vector<1x1x16x16xf32> to vector<16x16xf32>
    %35 = vector.shape_cast %26 : vector<16x16xf32> to vector<1x1x16x16xf32>
    tpu.vector_store %arg3[%c0_39, %c2_40, %c0_41, %c0_42], %35 {strides = array<i32>} : memref<1x4x16x16xf32, #tpu.memory_space<vmem>>, vector<1x1x16x16xf32>,
    %c0_43 = arith.constant 0 : index
    %c3_44 = arith.constant 3 : index
    %c0_45 = arith.constant 0 : index
    %c0_46 = arith.constant 0 : index
    %36 = vector.load %arg3[%c0_43, %c3_44, %c0_45, %c0_46] : memref<1x4x16x16xf32, #tpu.memory_space<vmem>>, vector<1x1x16x16xf32>
    %37 = vector.shape_cast %36 : vector<1x1x16x16xf32> to vector<16x16xf32>
    %38 = vector.shape_cast %26 : vector<16x16xf32> to vector<1x1x16x16xf32>
    tpu.vector_store %arg3[%c0_43, %c3_44, %c0_45, %c0_46], %38 {strides = array<i32>} : memref<1x4x16x16xf32, #tpu.memory_space<vmem>>, vector<1x1x16x16xf32>,
    return
  }
  func.func @transform_0(%arg0: i32, %arg1: i32) -> (i32, i32, i32, i32) {
    %c0_i32 = arith.constant 0 : i32
    %c0_i32_0 = arith.constant 0 : i32
    %c0_i32_1 = arith.constant 0 : i32
    return %arg0, %arg1, %c0_i32, %c0_i32_0 : i32, i32, i32, i32
  }
  func.func @transform_1(%arg0: i32, %arg1: i32) -> (i32, i32, i32, i32) {
    %c0_i32 = arith.constant 0 : i32
    %c0_i32_0 = arith.constant 0 : i32
    %c0_i32_1 = arith.constant 0 : i32
    return %arg0, %arg1, %c0_i32, %c0_i32_0 : i32, i32, i32, i32
  }
}

</mosaic_0001>

<llo_original>
// kernel: tpu_custom_call.1
$region0: #{tpu_custom_call.1}
  #allocation0 [shape = 'u32[]', space=smem, size = 0x4, offset = 0x4, fixed_abs, tag = 'smem constant byte address 0x4 - core index']
  #allocation1 [shape = 'u32[144,128]{1,0:T(1,128)}', space=vmem, size = 0x12000, scoped, tag = 'internal scratch']
  #allocation2 [shape = 'f32[18,18]{1,0:T(8,128)}', space=vmem, size = 0x3000, scoped, tag = 'scratch operand']
  #allocation3 [shape = 'f32[18,16]{1,0:T(8,128)}', space=vmem, size = 0x3000, scoped, tag = 'scratch operand']
  %s0 = inlined_call_operand.hbm [shape: f32[2,4,16,16], index: 0, kind: input, shape index: {}]
  %s1 = inlined_call_operand.hbm [shape: f32[2,4,16,16], index: 1, kind: output, shape index: {}]
  %s2 = sld [smem:[#allocation0]]
  $region41: #{tpu_custom_call.1} parent=0
    _
  %s4 = ssub.s32 1, %s2
  %s5 = scalar_select 0, %s4, %s2
  $region1: #{tpu_custom_call.1} parent=0
    #allocation4 [shape = 'u8[65536]{0}', space=vmem, size = 0x10000, scoped, tag = 'input window, operand 0']
    #allocation5 [shape = 's32[2]{0}', space=sflag, size = 0x8, scoped, tag = 'scoped memory for tpu_custom_call.1']
    #allocation6 [shape = 's32[2]{0}', space=sflag, size = 0x8, scoped, tag = 'scoped memory for tpu_custom_call.1']
    #allocation7 [shape = 'u8[65536]{0}', space=vmem, size = 0x10000, scoped, tag = 'output window, operand 0']
    %6 = vsyncpa [#allocation5], 0
    %s7 = scalar_lea.sflag [#allocation5], 1
    %8 = vsyncpa %s7, 0
    %9 = vsyncpa [#allocation6], 0
    %s10 = scalar_lea.sflag [#allocation6], 1
    %11 = vsyncpa %s10, 0
    loop: start=0, step=1, limit=4
    $region2: #{tpu_custom_call.1} parent=1 // loop_pre_header
      _
    $region3: #{tpu_custom_call.1} parent=1 // loop_header
      %s13 = sphi 0, %s17
      %p14 = scmp.ge.s32.totalorder %s13, 4
      %s20 = sphi 0, %s32
      %s21 = sphi 0, %s28
      %s22 = sphi 0, %s20
      %s23 = sphi 0, %s21
      %s24 = sphi 0, %s22
      %s25 = sphi 0, %s23
      %s37 = sphi 0, %s39
      %s40 = sphi 0, %s37
      %s41 = sphi 0, %s40
      %s57 = sphi 0, %s41
      %s65 = sphi 0, %s67
      %s68 = sphi 0, %s65
      %s69 = sphi 0, %s68
      %s85 = sphi 0, %s69
    $region4: #{tpu_custom_call.1} parent=1 // loop_header_branch
      %16 = sbr.rel (%p14) target = $region8
    $region5: #{tpu_custom_call.1} parent=1 // loop_body
      %s18 = ssub.s32 %s13, 1
      %s19 = ssub.s32 %s13, 2
      %s26 = sadd.s32 1, %s21
      %p27 = scmp.ge.s32.totalorder %s26, 1
      %s28 = scalar_select %p27, 0, %s26
      %s29 = sadd.s32 1, %s20
      %s30 = scalar_select %p27, %s29, %s20
      %p31 = scmp.ge.s32.totalorder %s30, 2
      %s32 = scalar_select %p31, 0, %s30
      %s33 = ssub.s32 %s20, %s32
      %s34 = ssub.s32 %s21, %s28
      %s35 = sor.u32 %s33, %s34
      %p36 = scmp.eq.s32.totalorder %s35, 0
      %s38 = sadd.s32 %s37, 1
      %s39 = scalar_select %p36, %s37, %s38
      %p42 = pneg %p36
      %p43 = scmp.eq.s32.totalorder %s13, 1
      %p44 = por %p42, %p43
      %p45 = scmp.ne.s32.totalorder %s37, %s40
      %p46 = scmp.eq.s32.totalorder %s13, 0
      %p47 = por %p45, %p46
      %p48 = scmp.ne.s32.totalorder %s37, %s40
      %p49 = scmp.eq.s32.totalorder %s18, 1
      %p50 = por %p48, %p49
      %p51 = scmp.ne.s32.totalorder %s40, %s41
      %p52 = scmp.eq.s32.totalorder %s18, 0
      %p53 = por %p51, %p52
      %p54 = scmp.ne.s32.totalorder %s40, %s41
      %p55 = scmp.eq.s32.totalorder %s19, 1
      %p56 = por %p54, %p55
      %p58 = scmp.ne.s32.totalorder %s41, %s57
      %p59 = scmp.eq.s32.totalorder %s19, 0
      %p60 = por %p58, %p59
      %s61 = ssub.s32 %s20, %s32
      %s62 = ssub.s32 %s21, %s28
      %s63 = sor.u32 %s61, %s62
      %p64 = scmp.eq.s32.totalorder %s63, 0
      %s66 = sadd.s32 %s65, 1
      %s67 = scalar_select %p64, %s65, %s66
      %p70 = pneg %p64
      %p71 = scmp.eq.s32.totalorder %s13, 1
      %p72 = por %p70, %p71
      %p73 = scmp.ne.s32.totalorder %s65, %s68
      %p74 = scmp.eq.s32.totalorder %s13, 0
      %p75 = por %p73, %p74
      %p76 = scmp.ne.s32.totalorder %s65, %s68
      %p77 = scmp.eq.s32.totalorder %s18, 1
      %p78 = por %p76, %p77
      %p79 = scmp.ne.s32.totalorder %s68, %s69
      %p80 = scmp.eq.s32.totalorder %s18, 0
      %p81 = por %p79, %p80
      %p82 = scmp.ne.s32.totalorder %s68, %s69
      %p83 = scmp.eq.s32.totalorder %s19, 1
      %p84 = por %p82, %p83
      %p86 = scmp.ne.s32.totalorder %s69, %s85
      %p87 = scmp.eq.s32.totalorder %s19, 0
      %p88 = por %p86, %p87
      %p89 = scmp.le.s32.totalorder 1, %s13
      %p90 = scmp.lt.s32.totalorder %s13, 3
      %p91 = pnand %p89, %p90
      %p92 = pneg %p91
      // Predicated region
      $region9: #{tpu_custom_call.1} parent=5 // pred_check
        _
      $region10: #{tpu_custom_call.1} parent=5 // pred_check_branch
        %94 = sbr.rel (%p91) target = $region12
      $region11: #{tpu_custom_call.1} parent=5 // pred_region
        %s95 = ssub.s32 %s13, 1
      $region12: #{tpu_custom_call.1} parent=5 // pred_fallthru
        _
      %p96 = scmp.lt.s32.totalorder %s13, 2
      // Predicated region
      $region13: #{tpu_custom_call.1} parent=5 // pred_check
        %p97 = pneg %p96
      $region14: #{tpu_custom_call.1} parent=5 // pred_check_branch
        %99 = sbr.rel (%p97) target = $region16
      $region15: #{tpu_custom_call.1} parent=5 // pred_region
        // Predicated region
        $region17: #{tpu_custom_call.1} parent=15 // pred_check
          %p100 = pneg %p47
        $region18: #{tpu_custom_call.1} parent=15 // pred_check_branch
          %102 = sbr.rel (%p100) target = $region20
        $region19: #{tpu_custom_call.1} parent=15 // pred_region
          %s103 = sand.u32 %s37, 1
          %s104 = scalar_lea.sflag [#allocation5], %s103
          %s105 = sand.u32 %s37, 1
          %s106 = smul.addr %s105, 64
          %s107 = scalar_lea.vmem [#allocation4], %s106
          %s108 = smul.u32 4, %s21
          %s110 = ssub.s32 1024, 1024
          %111 = vsyncadd %s104, %s110
          %s112 = smul.addr %s108, 2
          %s113 = smul.addr %s20, 8
          %s114 = sadd.s32 %s112, %s113
          %s115 = smul.addr %s114, 128
          %s116 = scalar_lea.hbm %s0, %s115
          %s117 = sshll.u32 %s107, 4
          %s118 = int_to_ptr.vmem [resolvable:$true] %s117
          %123 = dma.hbm_to_vmem [thread:$0]  %s116, 1024, %s118, %s104, 128, 128, 8
        $region20: #{tpu_custom_call.1} parent=15 // pred_fallthru
          _
      $region16: #{tpu_custom_call.1} parent=5 // pred_fallthru
        _
      %p124 = scmp.le.s32.totalorder 1, %s13
      %p125 = scmp.lt.s32.totalorder %s13, 3
      %p126 = pnand %p124, %p125
      %p127 = pneg %p126
      // Predicated region
      $region21: #{tpu_custom_call.1} parent=5 // pred_check
        _
      $region22: #{tpu_custom_call.1} parent=5 // pred_check_branch
        %129 = sbr.rel (%p126) target = $region24
      $region23: #{tpu_custom_call.1} parent=5 // pred_region
        %s130 = ssub.s32 %s13, 1
        %s131 = sand.u32 %s40, 1
        %s132 = scalar_lea.sflag [#allocation5], %s131
        %s133 = sand.u32 %s40, 1
        %s134 = smul.addr %s133, 64
        %s135 = scalar_lea.vmem [#allocation4], %s134
        // Predicated region
        $region25: #{tpu_custom_call.1} parent=23 // pred_check
          %p136 = pneg %p53
        $region26: #{tpu_custom_call.1} parent=23 // pred_check_branch
          %138 = sbr.rel (%p136) target = $region28
        $region27: #{tpu_custom_call.1} parent=23 // pred_region
          %139 = dma.done %s132, 1024
        $region28: #{tpu_custom_call.1} parent=23 // pred_fallthru
          _
        %s140 = sand.u32 %s40, 1
        %s141 = scalar_lea.sflag [#allocation5], %s140
        %s142 = sand.u32 %s40, 1
        %s143 = smul.addr %s142, 64
        %s144 = scalar_lea.vmem [#allocation4], %s143
        %p145 = pneg %p53
        %p146 = pneg %p50
        %p147 = pneg %p81
        %p148 = pneg %p78
        %s149 = sand.u32 %s68, 1
        %s150 = scalar_lea.sflag [#allocation6], %s149
        %s151 = sand.u32 %s68, 1
        %s152 = smul.addr %s151, 64
        %s153 = scalar_lea.vmem [#allocation7], %s152
        %s154 = smul.u32 4, %s23
        %s155 = smul.u32 4, %s23
        %vm156 = vcmask 146432
        %157 = vst.msk [vmem:[#allocation2] sm:$0xff] %vm156, 0.0
        %158 = vst.msk [vmem:[#allocation2 + $0x8] sm:$0xff] %vm156, 0.0
        %vm159 = vcmask 140288
        %160 = vst.msk [vmem:[#allocation2 + $0x10] sm:$0x3] %vm159, 0.0
        %v161 = vld [vmem:[%s135] sm:$0xff]
        %v162 = vld [vmem:[%s135 + $0x8] sm:$0xff]
        %s163 = scalar_lea.vmem %s135, 16 [#allocation4]
        %v164 = vld [vmem:[%s163] sm:$0xff]
        %v165 = vld [vmem:[%s163 + $0x8] sm:$0xff]
        %v166 = vadd.f32 %v161, %v164
        %v167 = vadd.f32 %v162, %v165
        %s168 = scalar_lea.vmem %s135, 32 [#allocation4]
        %v169 = vld [vmem:[%s168] sm:$0xff]
        %v170 = vld [vmem:[%s168 + $0x8] sm:$0xff]
        %v171 = vadd.f32 %v166, %v169
        %v172 = vadd.f32 %v167, %v170
        %s173 = scalar_lea.vmem %s135, 48 [#allocation4]
        %v174 = vld [vmem:[%s173] sm:$0xff]
        %v175 = vld [vmem:[%s173 + $0x8] sm:$0xff]
        %v176 = vadd.f32 %v171, %v174
        %v177 = vadd.f32 %v172, %v175
        %180 = vrot.lane.b32.xlu0 %v176, 1
        %v181 = vpop.permute.xlu0 %180
        %182 = vrot.lane.b32.xlu0 %v177, 1
        %v183 = vpop.permute.xlu0 %182
        %vm186 = vcmask 138248
        %187 = vst.msk [vmem:[#allocation2 + $0x1] sm:$0xff] %vm186, %v181
        %188 = vst.msk [vmem:[#allocation2 + $0x9] sm:$0xff] %vm186, %v183
        %v189 = vld [vmem:[#allocation2] sm:$0xff]
        %v190 = vld [vmem:[#allocation2 + $0x8] sm:$0xff]
        %v191 = vld [vmem:[#allocation2 + $0x10] sm:$0x3]
        %195 = vrot.lane.b32.xlu0 %v189, 127
        %v196 = vpop.permute.xlu0 %195
        %197 = vrot.lane.b32.xlu0 %v190, 127
        %v198 = vpop.permute.xlu0 %197
        %199 = vrot.lane.b32.xlu0 %v191, 127
        %v200 = vpop.permute.xlu0 %199
        %v204 = vadd.f32 %v189, %v196
        %v205 = vadd.f32 %v190, %v198
        %v206 = vadd.f32 %v191, %v200
        %207 = vrot.lane.b32.xlu0 %v189, 126
        %v208 = vpop.permute.xlu0 %207
        %209 = vrot.lane.b32.xlu0 %v190, 126
        %v210 = vpop.permute.xlu0 %209
        %211 = vrot.lane.b32.xlu0 %v191, 126
        %v212 = vpop.permute.xlu0 %211
        %v216 = vadd.f32 %v204, %v208
        %v217 = vadd.f32 %v205, %v210
        %v218 = vadd.f32 %v206, %v212
        %vm219 = vcmask 130048
        %220 = vst.msk [vmem:[#allocation3] sm:$0xff] %vm219, %v216
        %221 = vst.msk [vmem:[#allocation3 + $0x8] sm:$0xff] %vm219, %v217
        %vm222 = vcmask 123904
        %223 = vst.msk [vmem:[#allocation3 + $0x10] sm:$0x3] %vm222, %v218
        %v224 = vld [vmem:[#allocation3] sm:$0xff]
        %v225 = vld [vmem:[#allocation3 + $0x8] sm:$0xff]
        %v226 = vld [vmem:[#allocation3 + $0x1] sm:$0xff]
        %v227 = vld [vmem:[#allocation3 + $0x9] sm:$0xff]
        %v228 = vadd.f32 %v224, %v226
        %v229 = vadd.f32 %v225, %v227
        %v230 = vld [vmem:[#allocation3 + $0x2] sm:$0xff]
        %v231 = vld [vmem:[#allocation3 + $0xa] sm:$0xff]
        %v232 = vadd.f32 %v228, %v230
        %v233 = vadd.f32 %v229, %v231
        %v234 = vmul.f32 %v232, 0.11111111
        %v235 = vmul.f32 %v233, 0.11111111
        %236 = vst.msk [vmem:[%s153] sm:$0xff] %vm219, %v234
        %237 = vst.msk [vmem:[%s153 + $0x8] sm:$0xff] %vm219, %v235
        %s238 = scalar_lea.vmem %s153, 16 [#allocation7]
        %239 = vst.msk [vmem:[%s238] sm:$0xff] %vm219, %v234
        %240 = vst.msk [vmem:[%s238 + $0x8] sm:$0xff] %vm219, %v235
        %s241 = scalar_lea.vmem %s153, 32 [#allocation7]
        %242 = vst.msk [vmem:[%s241] sm:$0xff] %vm219, %v234
        %243 = vst.msk [vmem:[%s241 + $0x8] sm:$0xff] %vm219, %v235
        %s244 = scalar_lea.vmem %s153, 48 [#allocation7]
        %245 = vst.msk [vmem:[%s244] sm:$0xff] %vm219, %v234
        %246 = vst.msk [vmem:[%s244 + $0x8] sm:$0xff] %vm219, %v235
        %s247 = sand.u32 %s68, 1
        %s248 = scalar_lea.sflag [#allocation6], %s247
        %s249 = sand.u32 %s68, 1
        %s250 = smul.addr %s249, 64
        %s251 = scalar_lea.vmem [#allocation7], %s250
        // Predicated region
        $region29: #{tpu_custom_call.1} parent=23 // pred_check
          %p252 = pneg %p78
        $region30: #{tpu_custom_call.1} parent=23 // pred_check_branch
          %254 = sbr.rel (%p252) target = $region32
        $region31: #{tpu_custom_call.1} parent=23 // pred_region
          %s255 = smul.u32 4, %s23
          %s257 = ssub.s32 1024, 1024
          %258 = vsyncadd %s248, %s257
          %s259 = smul.addr %s255, 2
          %s260 = smul.addr %s22, 8
          %s261 = sadd.s32 %s259, %s260
          %s262 = smul.addr %s261, 128
          %s263 = scalar_lea.hbm %s1, %s262
          %s264 = sshll.u32 %s251, 4
          %s265 = int_to_ptr.vmem [resolvable:$true] %s264
          %270 = dma.vmem_to_hbm [thread:$0]  %s265, 1024, %s263, %s248, 128, 128, 8
        $region32: #{tpu_custom_call.1} parent=23 // pred_fallthru
          _
      $region24: #{tpu_custom_call.1} parent=5 // pred_fallthru
        _
      %p271 = scmp.le.s32.totalorder 2, %s13
      // Predicated region
      $region33: #{tpu_custom_call.1} parent=5 // pred_check
        %p272 = pneg %p271
      $region34: #{tpu_custom_call.1} parent=5 // pred_check_branch
        %274 = sbr.rel (%p272) target = $region36
      $region35: #{tpu_custom_call.1} parent=5 // pred_region
        %s275 = ssub.s32 %s13, 2
        // Predicated region
        $region37: #{tpu_custom_call.1} parent=35 // pred_check
          %p276 = pneg %p84
        $region38: #{tpu_custom_call.1} parent=35 // pred_check_branch
          %278 = sbr.rel (%p276) target = $region40
        $region39: #{tpu_custom_call.1} parent=35 // pred_region
          %s279 = sand.u32 %s69, 1
          %s280 = scalar_lea.sflag [#allocation6], %s279
          %s281 = sand.u32 %s69, 1
          %s282 = smul.addr %s281, 64
          %s283 = scalar_lea.vmem [#allocation7], %s282
          %284 = dma.done %s280, 1024
        $region40: #{tpu_custom_call.1} parent=35 // pred_fallthru
          _
      $region36: #{tpu_custom_call.1} parent=5 // pred_fallthru
        _
    $region6: #{tpu_custom_call.1} parent=1 // loop_footer
      %s17 = sadd.s32 1, %s13
    $region7: #{tpu_custom_call.1} parent=1 // loop_footer_branch
      %12 = sbr.rel target = $region3
    $region8: #{tpu_custom_call.1} parent=1 // loop_exit
      _
    %285 = vsyncpa [#allocation5], 1
    %s286 = scalar_lea.sflag [#allocation5], 1
    %287 = vsyncpa %s286, 1
    %288 = vsyncpa [#allocation6], 1
    %s289 = scalar_lea.sflag [#allocation6], 1
    %290 = vsyncpa %s289, 1

</llo_original>
